<compile_context>
chip_gen: v7x
topology: tpu7x:2x2x1
jax: 0.10.0
libtpu: 0.0.40
codegen_flags: <defaults>
</compile_context>

<pallas_src>
import functools

import jax
import jax.numpy as jnp
from jax.experimental import pallas as pl
from jax.experimental.pallas import tpu as pltpu


def _cmin_causal_kernel(x_ref, d_ref, dnrm_ref, wf_ref, dw_ref, bf_ref, mask_ref,
                        out_ref, *, alpha, num_anchors):
    A = num_anchors
    bt, seg, H = x_ref.shape
    C = wf_ref.shape[1]                                   # 3A

    x_raw = x_ref[...]                                    # [bt, seg, H] native dtype
    x = x_raw.astype(jnp.float32)                         # f32 for VPU math (v5e-safe)
    d = d_ref[...]                                        # [seg, H]   (broadcast over bt)
    d_nrm = dnrm_ref[...][None]                           # [1, seg, 1]

    # Per-row scalars (only [.., 1] columns touch the wide slab).
    sumsq = jnp.sum(x * x, axis=-1, keepdims=True)        # [bt, seg, 1]
    dot = jnp.sum(x * d[None], axis=-1, keepdims=True)    # [bt, seg, 1]  = <x, d>
    x_nrm = jnp.sqrt(sumsq)
    # 1 / max(||x||, 1e-12)  ==  rsqrt(max(sumsq, 1e-24))   (F.normalize clamp)
    inv_xn = jax.lax.rsqrt(jnp.maximum(sumsq, 1e-24))
    # nn.CosineSimilarity(dim=-1):  <x, d> / max(||x||*||d||, 1e-8)
    cos = dot / jnp.maximum(x_nrm * d_nrm, 1e-8)

    # Single fused MXU projection on the raw x; per-row scaling applied afterwards.
    proj = jnp.dot(x.reshape(bt * seg, H), wf_ref[...],
                   preferred_element_type=jnp.float32).reshape(bt, seg, C)

    out = inv_xn * proj - alpha * cos * dw_ref[...][None] + bf_ref[...][None]

    # Fused epilogue: sigmoid+mask on the first A lanes, identity on the 2A box lanes
    # (mask is pre-padded with ones there) — one wide store.
    lane = jax.lax.broadcasted_iota(jnp.int32, (bt, seg, C), 2)
    res = jnp.where(lane < A, jax.nn.sigmoid(out), out) * mask_ref[...][None]
    out_ref[...] = res.astype(out_ref.dtype)


def _cmin_noncausal_kernel(x_ref, wf_ref, bf_ref, mask_ref, out_ref, *, num_anchors):
    A = num_anchors
    bt, seg, H = x_ref.shape
    C = wf_ref.shape[1]                                   # 3A

    x = x_ref[...].astype(jnp.float32)
    out = jnp.dot(x.reshape(bt * seg, H), wf_ref[...],
                  preferred_element_type=jnp.float32).reshape(bt, seg, C)
    out = out + bf_ref[...][None]

    lane = jax.lax.broadcasted_iota(jnp.int32, (bt, seg, C), 2)
    res = jnp.where(lane < A, jax.nn.sigmoid(out), out) * mask_ref[...][None]
    out_ref[...] = res.astype(out_ref.dtype)


def _pick_batch_tile(B, seg, target_rows=1024):
    """Whole batch items per tile; ~512-1024 rows keeps the DMA pipeline near roofline."""
    bt = max(1, min(B, target_rows // max(seg, 1)))
    while B % bt:
        bt -= 1
    return bt


def cmin_predictor(mmfeats, ious1dmask, params, *, causal, tau, gamma, alpha):
    B, seg, H = mmfeats.shape
    ws = params['w_score'].astype(jnp.float32)            # [A, H]  (Conv1d k=1 weight)
    wr = params['w_reg'].astype(jnp.float32)              # [2A, H]
    br = params['b_reg'].astype(jnp.float32).reshape(1, -1)   # [1, 2A]
    A = ws.shape[0]
    C = 3 * A

    # Keep mmfeats in its native dtype (no f32 upcast pass over HBM).
    x = mmfeats

    # ious1dmask broadcasts over the batch in the torch module -> pass it once as
    # [seg, 3A] (ones in the 2A box lanes so the fused store needs no second op).
    mask = ious1dmask.astype(jnp.float32).reshape(seg, A)
    mask3 = jnp.concatenate([mask, jnp.ones((seg, 2 * A), jnp.float32)], axis=1)

    bt = _pick_batch_tile(B, seg)
    grid = (B // bt,)
    x_spec = pl.BlockSpec((bt, seg, H), lambda i: (i, 0, 0))
    out_spec = pl.BlockSpec((bt, seg, C), lambda i: (i, 0, 0))
    out_shape = jax.ShapeDtypeStruct((B, seg, C), jnp.float32)
    cparams = pltpu.CompilerParams(dimension_semantics=("parallel",))

    if causal:
        # Hoisted, data-independent weight preprocessing (done once, outside the kernel).
        wn = jnp.sqrt(jnp.sum(ws * ws, axis=1, keepdims=True))        # [A, 1]
        ws_eff = (tau / (wn + gamma)) * ws                            # [A, H]
        w_fused = jnp.concatenate([ws_eff, wr], axis=0).T             # [H, 3A]
        b_fused = jnp.concatenate([jnp.zeros((1, A), jnp.float32), br], axis=1)  # [1, 3A]

        # Batch-invariant d terms (NOT broadcast to B in HBM).
        d = params['d'].astype(jnp.float32).reshape(seg, H)
        d_nrm = jnp.sqrt(jnp.sum(d * d, axis=-1, keepdims=True))      # [seg, 1]
        d_hat = d / jnp.maximum(d_nrm, 1e-12)                         # [seg, H]
        dW = jnp.dot(d_hat, w_fused)                                  # [seg, 3A]

        kernel = functools.partial(_cmin_causal_kernel, alpha=alpha, num_anchors=A)
        out3 = pl.pallas_call(
            kernel,
            out_shape=out_shape,
            grid_spec=pltpu.PrefetchScalarGridSpec(
                num_scalar_prefetch=0,
                grid=grid,
                in_specs=[
                    x_spec,                                           # x       [bt,seg,H]
                    pl.BlockSpec((seg, H), lambda i: (0, 0)),         # d       [seg,H]
                    pl.BlockSpec((seg, 1), lambda i: (0, 0)),         # ||d||   [seg,1]
                    pl.BlockSpec((H, C), lambda i: (0, 0)),           # W_fused [H,3A]
                    pl.BlockSpec((seg, C), lambda i: (0, 0)),         # d_hat@W [seg,3A]
                    pl.BlockSpec((1, C), lambda i: (0, 0)),           # bias    [1,3A]
                    pl.BlockSpec((seg, C), lambda i: (0, 0)),         # mask    [seg,3A]
                ],
                out_specs=out_spec,
            ),
            compiler_params=cparams,
        )(x, d, d_nrm, w_fused, dW, b_fused, mask3)
    else:
        bs = params['b_score'].astype(jnp.float32).reshape(1, -1)     # [1, A]
        w_fused = jnp.concatenate([ws, wr], axis=0).T                 # [H, 3A]
        b_fused = jnp.concatenate([bs, br], axis=1)                   # [1, 3A]

        kernel = functools.partial(_cmin_noncausal_kernel, num_anchors=A)
        out3 = pl.pallas_call(
            kernel,
            out_shape=out_shape,
            grid_spec=pltpu.PrefetchScalarGridSpec(
                num_scalar_prefetch=0,
                grid=grid,
                in_specs=[
                    x_spec,                                           # x       [bt,seg,H]
                    pl.BlockSpec((H, C), lambda i: (0, 0)),           # W_fused [H,3A]
                    pl.BlockSpec((1, C), lambda i: (0, 0)),           # bias    [1,3A]
                    pl.BlockSpec((seg, C), lambda i: (0, 0)),         # mask    [seg,3A]
                ],
                out_specs=out_spec,
            ),
            compiler_params=cparams,
        )(x, w_fused, b_fused, mask3)

    iou_predict = out3[:, :, :A].reshape(B, seg * A)
    box_predict = out3[:, :, A:].reshape(B, seg * A, 2)
    return iou_predict, box_predict


def reference(mmfeats, ious1dmask, params, *, causal, tau, gamma, alpha):
    """Pure-JAX replica of the PyTorch forward (causal eval / non-causal)."""
    B, seg, H = mmfeats.shape
    mmfeats = mmfeats.astype(jnp.float32)
    ws = params['w_score']
    A = ws.shape[0]
    if causal:
        d = params['d']
        x_nrm = jnp.linalg.norm(mmfeats, axis=-1, keepdims=True)
        d_nrm = jnp.linalg.norm(d, axis=-1, keepdims=True)
        cos = jnp.sum(mmfeats * d, -1, keepdims=True) / jnp.maximum(x_nrm * d_nrm, 1e-8)
        bias = cos * (d / jnp.maximum(d_nrm, 1e-12))
        feat = mmfeats / jnp.maximum(x_nrm, 1e-12) - alpha * bias
        logits = tau * jnp.einsum('bsh,ah->bsa', feat, ws) / (
            jnp.linalg.norm(ws, axis=-1)[None, None, :] + gamma)
    else:
        feat = mmfeats
        logits = jnp.einsum('bsh,ah->bsa', feat, ws) + params['b_score'][0][None, None, :]
    iou = jax.nn.sigmoid(logits).reshape(B, seg * A) * ious1dmask.astype(jnp.float32)
    reg = jnp.einsum('bsh,ch->bsc', feat, params['w_reg']) + params['b_reg'][0][None, None, :]
    box = reg.reshape(B, seg * A, 2)
    return iou, box


if __name__ == "__main__":
    # Small shapes consistent with the module.
    B, seg, H = 2, 8, 32
    anchors = (8, 16, 32, 64)
    A = len(anchors)
    tau, gamma, alpha = 10.0, 1e-3, 0.5

    key = jax.random.PRNGKey(0)
    k_x, k_d, k_ws, k_bs, k_wr, k_br, k_m = jax.random.split(key, 7)

    mmfeats = jax.random.normal(k_x, (B, seg, H), dtype=jnp.float32)
    params = {
        # __init__ registers d as zeros; a nonzero deterministic buffer is used here so
        # the cosine-bias eval branch is actually exercised.
        'd': jax.random.normal(k_d, (1, seg, H), dtype=jnp.float32) * 0.1,
        'w_score': jax.random.normal(k_ws, (A, H), dtype=jnp.float32) * 0.1,   # Conv1d(H, A, 1, bias=False)
        'b_score': jax.random.normal(k_bs, (1, A), dtype=jnp.float32) * 0.1,   # only used when causal=False
        'w_reg': jax.random.normal(k_wr, (2 * A, H), dtype=jnp.float32) * 0.1,  # Conv1d(H, 2A, 1)
        'b_reg': jax.random.normal(k_br, (1, 2 * A), dtype=jnp.float32) * 0.1,
    }
    ious1dmask = jax.random.bernoulli(k_m, 0.7, (1, seg * A)).astype(jnp.float32)

    for causal in (True, False):
        iou_pred, box_pred = cmin_predictor(mmfeats, ious1dmask, params,
                                            causal=causal, tau=tau, gamma=gamma, alpha=alpha)
        jax.block_until_ready((iou_pred, box_pred))

        iou_ref, box_ref = reference(mmfeats, ious1dmask, params,
                                     causal=causal, tau=tau, gamma=gamma, alpha=alpha)

        assert iou_pred.shape == (B, seg * A)
        assert box_pred.shape == (B, seg * A, 2)
        assert jnp.allclose(iou_pred, iou_ref, rtol=1e-4, atol=1e-4), f"iou mismatch causal={causal}"
        assert jnp.allclose(box_pred, box_ref, rtol=1e-4, atol=1e-4), f"box mismatch causal={causal}"

    print("KERNEL_OK")
</pallas_src>

<mosaic_0001>
module attributes {stable_mosaic.version = 11 : i64} {
  func.func @_cmin_causal_kernel(%arg0: i32, %arg1: memref<2x8x32xf32, #tpu.memory_space<vmem>>, %arg2: memref<8x32xf32, #tpu.memory_space<vmem>>, %arg3: memref<8x1xf32, #tpu.memory_space<vmem>>, %arg4: memref<32x12xf32, #tpu.memory_space<vmem>>, %arg5: memref<8x12xf32, #tpu.memory_space<vmem>>, %arg6: memref<1x12xf32, #tpu.memory_space<vmem>>, %arg7: memref<8x12xf32, #tpu.memory_space<vmem>>, %arg8: memref<2x8x12xf32, #tpu.memory_space<vmem>>) attributes {dimension_semantics = [#tpu.dimension_semantics<parallel>], iteration_bounds = array<i64: 1>, scalar_prefetch = 0 : i64, scratch_operands = 0 : i64, tpu.core_type = #tpu.core_type<tc>, window_params = [{transform_indices = @transform_0, window_bounds = array<i64: 2, 8, 32>}, {pipeline_mode = #tpu.pipeline_mode<synchronous>, transform_indices = @transform_1, window_bounds = array<i64: 8, 32>}, {pipeline_mode = #tpu.pipeline_mode<synchronous>, transform_indices = @transform_2, window_bounds = array<i64: 8, 1>}, {pipeline_mode = #tpu.pipeline_mode<synchronous>, transform_indices = @transform_3, window_bounds = array<i64: 32, 12>}, {pipeline_mode = #tpu.pipeline_mode<synchronous>, transform_indices = @transform_4, window_bounds = array<i64: 8, 12>}, {pipeline_mode = #tpu.pipeline_mode<synchronous>, transform_indices = @transform_5, window_bounds = array<i64: 1, 12>}, {pipeline_mode = #tpu.pipeline_mode<synchronous>, transform_indices = @transform_6, window_bounds = array<i64: 8, 12>}, {transform_indices = @transform_7, window_bounds = array<i64: 2, 8, 12>}]} {
    %c0 = arith.constant 0 : index
    %c0_0 = arith.constant 0 : index
    %c0_1 = arith.constant 0 : index
    %0 = vector.load %arg1[%c0, %c0_0, %c0_1] : memref<2x8x32xf32, #tpu.memory_space<vmem>>, vector<2x8x32xf32>
    %c0_2 = arith.constant 0 : index
    %c0_3 = arith.constant 0 : index
    %1 = vector.load %arg2[%c0_2, %c0_3] : memref<8x32xf32, #tpu.memory_space<vmem>>, vector<8x32xf32>
    %c0_4 = arith.constant 0 : index
    %c0_5 = arith.constant 0 : index
    %2 = vector.load %arg3[%c0_4, %c0_5] : memref<8x1xf32, #tpu.memory_space<vmem>>, vector<8x1xf32>
    %3 = vector.shape_cast %2 : vector<8x1xf32> to vector<1x8x1xf32>
    %4 = arith.mulf %0, %0 : vector<2x8x32xf32>
    %cst = arith.constant dense<0.000000e+00> : vector<2x8xf32>
    %5 = vector.multi_reduction <add>, %4, %cst [2] : vector<2x8x32xf32> to vector<2x8xf32>
    %6 = vector.shape_cast %5 : vector<2x8xf32> to vector<2x8x1xf32>
    %7 = vector.shape_cast %1 : vector<8x32xf32> to vector<1x8x32xf32>
    %8 = vector.broadcast %7 : vector<1x8x32xf32> to vector<2x8x32xf32>
    %9 = arith.mulf %0, %8 : vector<2x8x32xf32>
    %cst_6 = arith.constant dense<0.000000e+00> : vector<2x8xf32>
    %10 = vector.multi_reduction <add>, %9, %cst_6 [2] : vector<2x8x32xf32> to vector<2x8xf32>
    %11 = vector.shape_cast %10 : vector<2x8xf32> to vector<2x8x1xf32>
    %12 = math.sqrt %6 : vector<2x8x1xf32>
    %cst_7 = arith.constant 1.000000e-24 : f32
    %13 = vector.broadcast %cst_7 : f32 to vector<2x8x1xf32>
    %14 = arith.maximumf %6, %13 : vector<2x8x1xf32>
    %15 = math.rsqrt %14 : vector<2x8x1xf32>
    %16 = vector.broadcast %3 : vector<1x8x1xf32> to vector<2x8x1xf32>
    %17 = arith.mulf %12, %16 : vector<2x8x1xf32>
    %cst_8 = arith.constant 9.99999993E-9 : f32
    %18 = vector.broadcast %cst_8 : f32 to vector<2x8x1xf32>
    %19 = arith.maximumf %17, %18 : vector<2x8x1xf32>
    %20 = arith.divf %11, %19 : vector<2x8x1xf32>
    %21 = vector.shape_cast %0 : vector<2x8x32xf32> to vector<16x32xf32>
    %c0_9 = arith.constant 0 : index
    %c0_10 = arith.constant 0 : index
    %22 = vector.load %arg4[%c0_9, %c0_10] : memref<32x12xf32, #tpu.memory_space<vmem>>, vector<32x12xf32>
    %cst_11 = arith.constant dense<0.000000e+00> : vector<16x12xf32>
    %23 = tpu.matmul %21, %22, %cst_11 {dimension_numbers = #tpu.dot_dimension_numbers<[1], [0], [0], [1], [0, 0, 1, 1], [], []>} : vector<16x32xf32>, vector<32x12xf32>, vector<16x12xf32> -> vector<16x12xf32>
    %24 = vector.shape_cast %23 : vector<16x12xf32> to vector<2x8x12xf32>
    %25 = vector.broadcast %15 : vector<2x8x1xf32> to vector<2x8x12xf32>
    %26 = arith.mulf %25, %24 : vector<2x8x12xf32>
    %cst_12 = arith.constant 5.000000e-01 : f32
    %27 = vector.broadcast %cst_12 : f32 to vector<2x8x1xf32>
    %28 = arith.mulf %27, %20 : vector<2x8x1xf32>
    %c0_13 = arith.constant 0 : index
    %c0_14 = arith.constant 0 : index
    %29 = vector.load %arg5[%c0_13, %c0_14] : memref<8x12xf32, #tpu.memory_space<vmem>>, vector<8x12xf32>
    %30 = vector.shape_cast %29 : vector<8x12xf32> to vector<1x8x12xf32>
    %31 = vector.broadcast %28 : vector<2x8x1xf32> to vector<2x8x12xf32>
    %32 = vector.broadcast %30 : vector<1x8x12xf32> to vector<2x8x12xf32>
    %33 = arith.mulf %31, %32 : vector<2x8x12xf32>
    %34 = arith.subf %26, %33 : vector<2x8x12xf32>
    %c0_15 = arith.constant 0 : index
    %c0_16 = arith.constant 0 : index
    %35 = vector.load %arg6[%c0_15, %c0_16] : memref<1x12xf32, #tpu.memory_space<vmem>>, vector<1x12xf32>
    %36 = vector.shape_cast %35 : vector<1x12xf32> to vector<1x1x12xf32>
    %37 = vector.broadcast %36 : vector<1x1x12xf32> to vector<2x8x12xf32>
    %38 = arith.addf %34, %37 : vector<2x8x12xf32>
    %39 = tpu.iota {dimensions = array<i32: 2>} : vector<2x8x12xi32>
    %c4_i32 = arith.constant 4 : i32
    %40 = vector.broadcast %c4_i32 : i32 to vector<2x8x12xi32>
    %41 = arith.cmpi slt, %39, %40 : vector<2x8x12xi32>
    %42 = arith.negf %38 : vector<2x8x12xf32>
    %43 = math.exp %42 : vector<2x8x12xf32>
    %cst_17 = arith.constant 1.000000e+00 : f32
    %44 = vector.broadcast %cst_17 : f32 to vector<2x8x12xf32>
    %45 = arith.addf %44, %43 : vector<2x8x12xf32>
    %46 = arith.divf %44, %45 : vector<2x8x12xf32>
    %47 = arith.select %41, %46, %38 : vector<2x8x12xi1>, vector<2x8x12xf32>
    %c0_18 = arith.constant 0 : index
    %c0_19 = arith.constant 0 : index
    %48 = vector.load %arg7[%c0_18, %c0_19] : memref<8x12xf32, #tpu.memory_space<vmem>>, vector<8x12xf32>
    %49 = vector.shape_cast %48 : vector<8x12xf32> to vector<1x8x12xf32>
    %50 = vector.broadcast %49 : vector<1x8x12xf32> to vector<2x8x12xf32>
    %51 = arith.mulf %47, %50 : vector<2x8x12xf32>
    %c0_20 = arith.constant 0 : index
    %c0_21 = arith.constant 0 : index
    %c0_22 = arith.constant 0 : index
    %52 = vector.load %arg8[%c0_20, %c0_21, %c0_22] : memref<2x8x12xf32, #tpu.memory_space<vmem>>, vector<2x8x12xf32>
    tpu.vector_store %arg8[%c0_20, %c0_21, %c0_22], %51 {strides = array<i32>} : memref<2x8x12xf32, #tpu.memory_space<vmem>>, vector<2x8x12xf32>,
    return
  }
  func.func @transform_0(%arg0: i32) -> (i32, i32, i32) {
    %c0_i32 = arith.constant 0 : i32
    %c0_i32_0 = arith.constant 0 : i32
    %c0_i32_1 = arith.constant 0 : i32
    return %arg0, %c0_i32, %c0_i32_0 : i32, i32, i32
  }
  func.func @transform_1(%arg0: i32) -> (i32, i32) {
    %c0_i32 = arith.constant 0 : i32
    %c0_i32_0 = arith.constant 0 : i32
    %c0_i32_1 = arith.constant 0 : i32
    return %c0_i32, %c0_i32_0 : i32, i32
  }
  func.func @transform_2(%arg0: i32) -> (i32, i32) {
    %c0_i32 = arith.constant 0 : i32
    %c0_i32_0 = arith.constant 0 : i32
    %c0_i32_1 = arith.constant 0 : i32
    return %c0_i32, %c0_i32_0 : i32, i32
  }
  func.func @transform_3(%arg0: i32) -> (i32, i32) {
    %c0_i32 = arith.constant 0 : i32
    %c0_i32_0 = arith.constant 0 : i32
    %c0_i32_1 = arith.constant 0 : i32
    return %c0_i32, %c0_i32_0 : i32, i32
  }
  func.func @transform_4(%arg0: i32) -> (i32, i32) {
    %c0_i32 = arith.constant 0 : i32
    %c0_i32_0 = arith.constant 0 : i32
    %c0_i32_1 = arith.constant 0 : i32
    return %c0_i32, %c0_i32_0 : i32, i32
  }
  func.func @transform_5(%arg0: i32) -> (i32, i32) {
    %c0_i32 = arith.constant 0 : i32
    %c0_i32_0 = arith.constant 0 : i32
    %c0_i32_1 = arith.constant 0 : i32
    return %c0_i32, %c0_i32_0 : i32, i32
  }
  func.func @transform_6(%arg0: i32) -> (i32, i32) {
    %c0_i32 = arith.constant 0 : i32
    %c0_i32_0 = arith.constant 0 : i32
    %c0_i32_1 = arith.constant 0 : i32
    return %c0_i32, %c0_i32_0 : i32, i32
  }
  func.func @transform_7(%arg0: i32) -> (i32, i32, i32) {
    %c0_i32 = arith.constant 0 : i32
    %c0_i32_0 = arith.constant 0 : i32
    %c0_i32_1 = arith.constant 0 : i32
    return %arg0, %c0_i32, %c0_i32_0 : i32, i32, i32
  }
}

</mosaic_0001>

<llo_original>
// kernel: tpu_custom_call.1
$region0: #{tpu_custom_call.1}
  #allocation0 [shape = 'u32[]', space=smem, size = 0x4, offset = 0x4, fixed_abs, tag = 'smem constant byte address 0x4 - core index']
  #allocation1 [shape = 'u32[144,128]{1,0:T(1,128)}', space=vmem, size = 0x12000, scoped, tag = 'internal scratch']
  %s0 = inlined_call_operand.vmem [shape: f32[2,8,32], index: 0, kind: input, shape index: {}]
  %s1 = inlined_call_operand.vmem [shape: f32[8,32], index: 1, kind: input, shape index: {}]
  %s2 = inlined_call_operand.vmem [shape: f32[8,1], index: 2, kind: input, shape index: {}]
  %s3 = inlined_call_operand.vmem [shape: f32[32,12], index: 3, kind: input, shape index: {}]
  %s4 = inlined_call_operand.vmem [shape: f32[8,12], index: 4, kind: input, shape index: {}]
  %s5 = inlined_call_operand.vmem [shape: f32[1,12], index: 5, kind: input, shape index: {}]
  %s6 = inlined_call_operand.vmem [shape: f32[8,12], index: 6, kind: input, shape index: {}]
  %s7 = inlined_call_operand.hbm [shape: f32[2,8,12], index: 7, kind: output, shape index: {}]
  %s8 = sld [smem:[#allocation0]]
  $region38: #{tpu_custom_call.1} parent=0
    _
  %s10 = ssub.s32 1, %s8
  %s11 = scalar_select 0, %s10, %s8
  $region1: #{tpu_custom_call.1} parent=0
    #allocation2 [shape = 'u8[8192]{0}', space=vmem, size = 0x2000, scoped, tag = 'output window, operand 0, single buffered']
    #allocation3 [shape = 's32[1]{0}', space=sflag, size = 0x4, scoped, tag = 'scoped memory for tpu_custom_call.1']
    %12 = vsyncpa [#allocation3], 0
    // Predicated region
    $region2: #{tpu_custom_call.1} parent=1 // pred_check
      _
    $region3: #{tpu_custom_call.1} parent=1 // pred_check_branch
      %14 = sbr.rel (0) target = $region5
    $region4: #{tpu_custom_call.1} parent=1 // pred_region
      _
    $region5: #{tpu_custom_call.1} parent=1 // pred_fallthru
      _
    // Predicated region
    $region6: #{tpu_custom_call.1} parent=1 // pred_check
      _
    $region7: #{tpu_custom_call.1} parent=1 // pred_check_branch
      %16 = sbr.rel (0) target = $region9
    $region8: #{tpu_custom_call.1} parent=1 // pred_region
      _
    $region9: #{tpu_custom_call.1} parent=1 // pred_fallthru
      _
    // Predicated region
    $region10: #{tpu_custom_call.1} parent=1 // pred_check
      _
    $region11: #{tpu_custom_call.1} parent=1 // pred_check_branch
      %18 = sbr.rel (0) target = $region13
    $region12: #{tpu_custom_call.1} parent=1 // pred_region
      _
    $region13: #{tpu_custom_call.1} parent=1 // pred_fallthru
      _
    // Predicated region
    $region14: #{tpu_custom_call.1} parent=1 // pred_check
      _
    $region15: #{tpu_custom_call.1} parent=1 // pred_check_branch
      %20 = sbr.rel (0) target = $region17
    $region16: #{tpu_custom_call.1} parent=1 // pred_region
      _
    $region17: #{tpu_custom_call.1} parent=1 // pred_fallthru
      _
    // Predicated region
    $region18: #{tpu_custom_call.1} parent=1 // pred_check
      _
    $region19: #{tpu_custom_call.1} parent=1 // pred_check_branch
      %22 = sbr.rel (0) target = $region21
    $region20: #{tpu_custom_call.1} parent=1 // pred_region
      _
    $region21: #{tpu_custom_call.1} parent=1 // pred_fallthru
      _
    // Predicated region
    $region22: #{tpu_custom_call.1} parent=1 // pred_check
      _
    $region23: #{tpu_custom_call.1} parent=1 // pred_check_branch
      %24 = sbr.rel (0) target = $region25
    $region24: #{tpu_custom_call.1} parent=1 // pred_region
      _
    $region25: #{tpu_custom_call.1} parent=1 // pred_fallthru
      _
    // Predicated region
    $region26: #{tpu_custom_call.1} parent=1 // pred_check
      _
    $region27: #{tpu_custom_call.1} parent=1 // pred_check_branch
      %26 = sbr.rel (0) target = $region29
    $region28: #{tpu_custom_call.1} parent=1 // pred_region
      _
    $region29: #{tpu_custom_call.1} parent=1 // pred_fallthru
      _
    %v27 = vld [vmem:[%s0] sm:$0xff]
    %v28 = vld [vmem:[%s0 + $0x8] sm:$0xff]
    %v29 = vld [vmem:[%s1] sm:$0xff]
    %v30 = vld [vmem:[%s2] sm:$0xff]
    %v31 = vmul.f32 %v27, %v27
    %v32 = vmul.f32 %v28, %v28
    %vm33 = vcmask 261120
    %v34 = vsel %vm33, %v31, 0.0
    %35 = vadd.xlane.f32.xlu0 %v34
    %v36 = vpop.xlane.xlu0 %35
    %v37 = vsel %vm33, %v32, 0.0
    %38 = vadd.xlane.f32.xlu0 %v37
    %v39 = vpop.xlane.xlu0 %38
    %v40 = vmul.f32 %v27, %v29
    %v41 = vmul.f32 %v28, %v29
    %v42 = vsel %vm33, %v40, 0.0
    %43 = vadd.xlane.f32.xlu0 %v42
    %v44 = vpop.xlane.xlu0 %43
    %v45 = vsel %vm33, %v41, 0.0
    %46 = vadd.xlane.f32.xlu0 %v45
    %v47 = vpop.xlane.xlu0 %46
    %v48 = vrsqrt.pop %v36
    %v49 = vmul.f32 %v36, %v48
    %vm50 = vcmp.eq.f32.partialorder %v36, inf
    %v51 = vsel %vm50, %v36, %v49
    %vm52 = vcmp.eq.f32.partialorder %v36, 0.0
    %v53 = vand.u32 %v36, 2147483648
    %v54 = vsel %vm52, %v53, %v51
    %v55 = vrsqrt.pop %v39
    %v56 = vmul.f32 %v39, %v55
    %vm57 = vcmp.eq.f32.partialorder %v39, inf
    %v58 = vsel %vm57, %v39, %v56
    %vm59 = vcmp.eq.f32.partialorder %v39, 0.0
    %v60 = vand.u32 %v39, 2147483648
    %v61 = vsel %vm59, %v60, %v58
    %v62 = vmax.f32 %v36, 1e-24
    %v63 = vmax.f32 %v39, 1e-24
    %v64 = vrsqrt.pop %v62
    %v65 = vrsqrt.pop %v63
    %v66 = vmul.f32 %v54, %v30
    %v67 = vmul.f32 %v61, %v30
    %v68 = vmax.f32 %v66, 1e-08
    %v69 = vmax.f32 %v67, 1e-08
    %v70 = vrcp.pop %v68
    %v71 = vmul.f32 %v44, %v70
    %v72 = vrcp.pop %v69
    %v73 = vmul.f32 %v47, %v72
    %v74 = vld [vmem:[%s3] sm:$0xff]
    %v75 = vld [vmem:[%s3 + $0x8] sm:$0xff]
    %v76 = vld [vmem:[%s3 + $0x10] sm:$0xff]
    %v77 = vld [vmem:[%s3 + $0x18] sm:$0xff]
    %v79 = vsel %vm33, %v27, 0
    %v82 = vsel %vm33, %v28, 0
    %84 = vmatprep.subr.mxu0 0.0
    %85 = vmatpush1.msra.mxu0 %v74
    %86 = vmatprep.subr.mxu0 0.0
    %87 = vmatpush1.msra.mxu0 %v75
    %88 = vmatprep.subr.mxu0 0.0
    %89 = vmatpush1.msra.mxu0 %v76
    %90 = vmatprep.subr.mxu0 0.0
    %91 = vmatpush1.msra.mxu0 %v77
    %92 = vmatprep.subr.mxu0 0.0
    %93 = vmatpush1.msra.mxu0 0.0
    %94 = vmatprep.subr.mxu0 0.0
    %95 = vmatpush1.msra.mxu0 0.0
    %96 = vmatprep.subr.mxu0 0.0
    %97 = vmatpush1.msra.mxu0 0.0
    %98 = vmatprep.subr.mxu0 0.0
    %99 = vmatpush1.msra.mxu0 0.0
    %100 = vmatprep.subr.mxu0 0.0
    %101 = vmatpush1.msra.mxu0 0.0
    %102 = vmatprep.subr.mxu0 0.0
    %103 = vmatpush1.msra.mxu0 0.0
    %104 = vmatprep.subr.mxu0 0.0
    %105 = vmatpush1.msra.mxu0 0.0
    %106 = vmatprep.subr.mxu0 0.0
    %107 = vmatpush1.msra.mxu0 0.0
    %108 = vmatprep.subr.mxu0 0.0
    %109 = vmatpush1.msra.mxu0 0.0
    %110 = vmatprep.subr.mxu0 0.0
    %111 = vmatpush1.msra.mxu0 0.0
    %112 = vmatprep.subr.mxu0 0.0
    %113 = vmatpush1.msra.mxu0 0.0
    %114 = vmatprep.subr.mxu0 0.0
    %115 = vmatpush1.msra.mxu0 0.0
    %116 = vmatprep.subr.mxu0 0.0
    %117 = vmatpush1.msra.mxu0 0.0
    %118 = vmatprep.subr.mxu0 0.0
    %119 = vmatpush1.msra.mxu0 0.0
    %120 = vmatprep.subr.mxu0 0.0
    %121 = vmatpush1.msra.mxu0 0.0
    %122 = vmatprep.subr.mxu0 0.0
    %123 = vmatpush1.msra.mxu0 0.0
    %124 = vmatprep.subr.mxu0 0.0
    %125 = vmatpush1.msra.mxu0 0.0
    %126 = vmatprep.subr.mxu0 0.0
    %127 = vmatpush1.msra.mxu0 0.0
    %128 = vmatprep.subr.mxu0 0.0
    %129 = vmatpush1.msra.mxu0 0.0
    %130 = vmatprep.subr.mxu0 0.0
    %131 = vmatpush1.msra.mxu0 0.0
    %132 = vmatprep.subr.mxu0 0.0
    %133 = vmatpush1.msra.mxu0 0.0
    %134 = vmatprep.subr.mxu0 0.0
    %135 = vmatpush1.msra.mxu0 0.0
    %136 = vmatprep.subr.mxu0 0.0
    %137 = vmatpush1.msra.mxu0 0.0
    %138 = vmatprep.subr.mxu0 0.0
    %139 = vmatpush1.msra.mxu0 0.0
    %140 = vmatprep.subr.mxu0 0.0
    %141 = vmatpush1.msra.mxu0 0.0
    %142 = vmatprep.subr.mxu0 0.0
    %143 = vmatpush1.msra.mxu0 0.0
    %144 = vmatprep.subr.mxu0 0.0
    %145 = vmatpush1.msra.mxu0 0.0
    %146 = vmatprep.subr.mxu0 0.0
    %147 = vmatpush1.msra.mxu0 0.0
    %148 = vmatprep.mubr.f32.mxu0 0.0
    %149 = vmatmul.mubr.f32.gmra.mrb[0].mxu0 %v79
    %v150 = vpop.f32.mrb[0].mxu0
    %v151 = vadd.f32 0.0, %v150
    %v152 = vpop.f32.mrb[0].mxu0
    %153 = vmatprep.mubr.f32.mxu0 0.0
    %154 = vmatmul.mubr.f32.gmra.mrb[0].mxu0 %v82
    %v155 = vpop.f32.mrb[0].mxu0
    %v156 = vadd.f32 0.0, %v155
    %v157 = vpop.f32.mrb[0].mxu0
    %158 = vdwg.mxu0
    %v159 = vmul.f32 %v64, %v151
    %v160 = vmul.f32 %v65, %v156
    %v161 = vmul.f32 %v71, 0.5
    %v162 = vmul.f32 %v73, 0.5
    %v163 = vld [vmem:[%s4] sm:$0xff]
    %165 = vset.pattern.permute.xlu0 0
    %166 = vperm.xlu0 %165, %v161
    %v167 = vpop.permute.xlu0 %166
    %170 = vset.pattern.permute.xlu0 0
    %171 = vperm.xlu0 %170, %v162
    %v172 = vpop.permute.xlu0 %171
    %v174 = vmul.f32 %v167, %v163
    %v175 = vmul.f32 %v172, %v163
    %v176 = vsub.f32 %v159, %v174
    %v177 = vsub.f32 %v160, %v175
    %v178 = vld [vmem:[%s5] sm:$0x1]
    %v180 = vlaneseq
    %v181 = vshrl.u32 %v180, 7
    %v182 = vsub.s32 0, %v181
    %v183 = vrot.slane %v178, %v182
    %v185 = vadd.f32 %v176, %v183
    %v186 = vadd.f32 %v177, %v183
    %v187 = vlaneseq
    %v188 = vand.u32 %v187, 127
    %vm189 = vcmp.lt.s32.totalorder %v188, 4
    %v190 = vxor.u32 %v185, 2147483648
    %v191 = vxor.u32 %v186, 2147483648
    %v192 = vmul.f32 %v190, 1.442695
    %v193 = vpow.pop %v192
    %v194 = vmul.f32 %v191, 1.442695
    %v195 = vpow.pop %v194
    %v196 = vadd.f32 %v193, 1.0
    %v197 = vadd.f32 %v195, 1.0
    %v198 = vrcp.pop %v196
    %v199 = vmul.f32 1.0, %v198
    %v200 = vrcp.pop %v197
    %v201 = vmul.f32 1.0, %v200
    %v202 = vsel %vm189, %v199, %v185
    %v203 = vsel %vm189, %v201, %v186
    %v204 = vld [vmem:[%s6] sm:$0xff]
    %v205 = vmul.f32 %v202, %v204
    %v206 = vmul.f32 %v203, %v204
    %vm207 = vcmask 97280
    %208 = vst.msk [vmem:[#allocation2] sm:$0xff] %vm207, %v205
    %209 = vst.msk [vmem:[#allocation2 + $0x8] sm:$0xff] %vm207, %v206
    // Predicated region
    $region30: #{tpu_custom_call.1} parent=1 // pred_check
      _
    $region31: #{tpu_custom_call.1} parent=1 // pred_check_branch
      %211 = sbr.rel (0) target = $region33
    $region32: #{tpu_custom_call.1} parent=1 // pred_region
      %s213 = ssub.s32 256, 256
      %214 = vsyncadd [#allocation3], %s213
      %s215 = sshll.u32 [#allocation2], 4
      %s216 = int_to_ptr.vmem [resolvable:$true] %s215
      %221 = dma.vmem_to_hbm [thread:$0]  %s216, 256, %s7, [#allocation3], 128, 128, 8
    $region33: #{tpu_custom_call.1} parent=1 // pred_fallthru
      _
    // Predicated region
    $region34: #{tpu_custom_call.1} parent=1 // pred_check
      _
    $region35: #{tpu_custom_call.1} parent=1 // pred_check_branch
      %223 = sbr.rel (0) target = $region37
    $region36: #{tpu_custom_call.1} parent=1 // pred_region
      %224 = dma.done [#allocation3], 256
    $region37: #{tpu_custom_call.1} parent=1 // pred_fallthru
      _
    %225 = vsyncpa [#allocation3], 1

</llo_original>
